<compile_context>
chip_gen: v7x
topology: tpu7x:2x2x1
jax: 0.10.0
libtpu: 0.0.40
codegen_flags: <defaults>
</compile_context>

<pallas_src>
import jax
import jax.numpy as jnp
from jax.experimental import pallas as pl
from jax.experimental.pallas import tpu as pltpu

n_features = 21
n_hidden1 = 32
n_hidden2 = 16
num_classes = 3

_LANE = 128          # hard lane-alignment requirement for the batch (last) dim
_MXU_ALIGN = 256     # v6e/v7x MXU column-group size (also fine on v5e)
_TB_CAP = 16384      # ~1.4 MB xT tile per buffer; double-buffered set ~10 MiB


def mlp_kernel(xT_ref, w1_ref, b1_ref, w2_ref, b2_ref, w3_ref, b3_ref, oT_ref):
    xT = xT_ref[...]                                                  # (21, TB)
    # layer 1 + ReLU : (32, 21) @ (21, TB) + (32, 1)
    h1 = jnp.dot(w1_ref[...], xT, preferred_element_type=jnp.float32) + b1_ref[...]
    h1 = jnp.maximum(h1, 0.0)                                         # (32, TB)
    # layer 2 + ReLU : (16, 32) @ (32, TB) + (16, 1)
    h2 = jnp.dot(w2_ref[...], h1, preferred_element_type=jnp.float32) + b2_ref[...]
    h2 = jnp.maximum(h2, 0.0)                                         # (16, TB)
    # layer 3 (logits): (3, 16) @ (16, TB) + (3, 1)
    out = jnp.dot(w3_ref[...], h2, preferred_element_type=jnp.float32) + b3_ref[...]
    oT_ref[...] = out.astype(oT_ref.dtype)                            # (3, TB)


def _round_up(n, m):
    return ((n + m - 1) // m) * m


def _choose_tiling(B):
    """Return (TB, B_pad).  TB is lane/MXU aligned; >=2 balanced tiles when
    the batch is big enough (so v7x megacore can shard the grid)."""
    if B <= _MXU_ALIGN:
        TB = _round_up(B, _LANE)
        return TB, TB
    n_tiles = max(2, pl.cdiv(B, _TB_CAP))
    TB = _round_up(pl.cdiv(B, n_tiles), _MXU_ALIGN)
    return TB, n_tiles * TB


def prepare_params(params):
    """One-time repack: weights stay PyTorch (out, in); biases -> (out, 1) columns."""
    return dict(
        w1=params["l1_w"], b1=params["l1_b"][:, None],
        w2=params["l2_w"], b2=params["l2_b"][:, None],
        w3=params["l3_w"], b3=params["l3_b"][:, None],
    )


def neural_net_forward(x, packed):
    """x: (B, n_features) float32; packed: output of prepare_params()."""
    B = x.shape[0]
    TB, B_pad = _choose_tiling(B)
    grid = B_pad // TB

    # Transpose (and pad the lane dim in the same copy) so the batch sits on
    # the 128-lane axis.  Padded columns produce garbage logits that are
    # sliced off below; there is no reduction over the batch inside the kernel.
    if B_pad != B:
        xT = jnp.pad(x, ((0, B_pad - B), (0, 0))).T
    else:
        xT = x.T

    w1, b1 = packed["w1"], packed["b1"]
    w2, b2 = packed["w2"], packed["b2"]
    w3, b3 = packed["w3"], packed["b3"]

    def resident(arr):
        # Full-array block, constant index_map -> stays VMEM-resident across grid.
        return pl.BlockSpec(arr.shape, lambda i: (0, 0))

    out_t = pl.pallas_call(
        mlp_kernel,
        out_shape=jax.ShapeDtypeStruct((num_classes, B_pad), jnp.float32),
        grid=(grid,),
        in_specs=[
            pl.BlockSpec((n_features, TB), lambda i: (0, i)),   # streamed X^T tiles
            resident(w1), resident(b1),
            resident(w2), resident(b2),
            resident(w3), resident(b3),
        ],
        out_specs=pl.BlockSpec((num_classes, TB), lambda i: (0, i)),
        compiler_params=pltpu.CompilerParams(
            dimension_semantics=("parallel",),
            vmem_limit_bytes=32 * 1024 * 1024,
        ),
    )(xT, w1, b1, w2, b2, w3, b3)

    return out_t.T[:B]


def init_params(key):
    """Deterministic init mimicking nn.Linear's U(-1/sqrt(fan_in), 1/sqrt(fan_in))."""
    keys = jax.random.split(key, 6)

    def lin(kw, kb, fan_in, fan_out):
        bound = 1.0 / jnp.sqrt(fan_in)
        w = jax.random.uniform(kw, (fan_out, fan_in), jnp.float32, -bound, bound)
        b = jax.random.uniform(kb, (fan_out,), jnp.float32, -bound, bound)
        return w, b

    l1_w, l1_b = lin(keys[0], keys[1], n_features, n_hidden1)
    l2_w, l2_b = lin(keys[2], keys[3], n_hidden1, n_hidden2)
    l3_w, l3_b = lin(keys[4], keys[5], n_hidden2, num_classes)
    return dict(l1_w=l1_w, l1_b=l1_b, l2_w=l2_w, l2_b=l2_b, l3_w=l3_w, l3_b=l3_b)


def reference_forward(x, p):
    """Faithful to the PyTorch module: out = l3(relu(l2(relu(l1(x)))))."""
    h1 = jnp.maximum(x @ p["l1_w"].T + p["l1_b"], 0.0)
    h2 = jnp.maximum(h1 @ p["l2_w"].T + p["l2_b"], 0.0)
    return h2 @ p["l3_w"].T + p["l3_b"]


if __name__ == "__main__":
    key = jax.random.PRNGKey(0)
    k_x, k_p = jax.random.split(key)

    params = init_params(k_p)
    packed = prepare_params(params)  # one-time repack, outside the call path

    # Tolerance note: default-precision f32 matmuls run as bf16 MXU passes;
    # the kernel contracts W@X^T while the reference contracts X@W^T, so the
    # two round differently by up to ~1e-2 absolute.  Real bugs (wrong layer,
    # missing bias/ReLU) produce errors >> 3e-2.
    ATOL = RTOL = 3e-2

    # Small shapes consistent with the module (batch=8, 21 features).
    batch = 8
    x = jax.random.normal(k_x, (batch, n_features), jnp.float32)
    out = jax.block_until_ready(neural_net_forward(x, packed))
    ref = reference_forward(x, params)
    assert out.shape == (batch, num_classes)
    assert jnp.allclose(out, ref, atol=ATOL, rtol=RTOL), "mismatch vs JAX reference"

    # Ragged batch (padded single-tile path).
    batch2 = 37
    x2 = jax.random.normal(k_x, (batch2, n_features), jnp.float32)
    out2 = jax.block_until_ready(neural_net_forward(x2, packed))
    ref2 = reference_forward(x2, params)
    assert out2.shape == (batch2, num_classes)
    assert jnp.allclose(out2, ref2, atol=ATOL, rtol=RTOL), "mismatch (padded path)"

    # Multi-tile grid path (2 balanced tiles -> exercises megacore sharding).
    batch3 = 700
    x3 = jax.random.normal(k_x, (batch3, n_features), jnp.float32)
    out3 = jax.block_until_ready(neural_net_forward(x3, packed))
    ref3 = reference_forward(x3, params)
    assert out3.shape == (batch3, num_classes)
    assert jnp.allclose(out3, ref3, atol=ATOL, rtol=RTOL), "mismatch (multi-tile path)"

    print("KERNEL_OK")
</pallas_src>

<mosaic_0001>
module attributes {stable_mosaic.version = 11 : i64} {
  func.func @mlp_kernel(%arg0: i32, %arg1: memref<21x128xf32, #tpu.memory_space<vmem>>, %arg2: memref<32x21xf32, #tpu.memory_space<vmem>>, %arg3: memref<32x1xf32, #tpu.memory_space<vmem>>, %arg4: memref<16x32xf32, #tpu.memory_space<vmem>>, %arg5: memref<16x1xf32, #tpu.memory_space<vmem>>, %arg6: memref<3x16xf32, #tpu.memory_space<vmem>>, %arg7: memref<3x1xf32, #tpu.memory_space<vmem>>, %arg8: memref<3x128xf32, #tpu.memory_space<vmem>>) attributes {dimension_semantics = [#tpu.dimension_semantics<parallel>], iteration_bounds = array<i64: 1>, scalar_prefetch = 0 : i64, scratch_operands = 0 : i64, tpu.core_type = #tpu.core_type<tc>, window_params = [{transform_indices = @transform_0, window_bounds = array<i64: 21, 128>}, {pipeline_mode = #tpu.pipeline_mode<synchronous>, transform_indices = @transform_1, window_bounds = array<i64: 32, 21>}, {pipeline_mode = #tpu.pipeline_mode<synchronous>, transform_indices = @transform_2, window_bounds = array<i64: 32, 1>}, {pipeline_mode = #tpu.pipeline_mode<synchronous>, transform_indices = @transform_3, window_bounds = array<i64: 16, 32>}, {pipeline_mode = #tpu.pipeline_mode<synchronous>, transform_indices = @transform_4, window_bounds = array<i64: 16, 1>}, {pipeline_mode = #tpu.pipeline_mode<synchronous>, transform_indices = @transform_5, window_bounds = array<i64: 3, 16>}, {pipeline_mode = #tpu.pipeline_mode<synchronous>, transform_indices = @transform_6, window_bounds = array<i64: 3, 1>}, {transform_indices = @transform_7, window_bounds = array<i64: 3, 128>}]} {
    %c0 = arith.constant 0 : index
    %c0_0 = arith.constant 0 : index
    %0 = vector.load %arg1[%c0, %c0_0] : memref<21x128xf32, #tpu.memory_space<vmem>>, vector<21x128xf32>
    %c0_1 = arith.constant 0 : index
    %c0_2 = arith.constant 0 : index
    %1 = vector.load %arg2[%c0_1, %c0_2] : memref<32x21xf32, #tpu.memory_space<vmem>>, vector<32x21xf32>
    %cst = arith.constant dense<0.000000e+00> : vector<32x128xf32>
    %2 = tpu.matmul %1, %0, %cst {dimension_numbers = #tpu.dot_dimension_numbers<[1], [0], [0], [1], [0, 0, 1, 1], [], []>} : vector<32x21xf32>, vector<21x128xf32>, vector<32x128xf32> -> vector<32x128xf32>
    %c0_3 = arith.constant 0 : index
    %c0_4 = arith.constant 0 : index
    %3 = vector.load %arg3[%c0_3, %c0_4] : memref<32x1xf32, #tpu.memory_space<vmem>>, vector<32x1xf32>
    %4 = vector.broadcast %3 : vector<32x1xf32> to vector<32x128xf32>
    %5 = arith.addf %2, %4 : vector<32x128xf32>
    %cst_5 = arith.constant 0.000000e+00 : f32
    %6 = vector.broadcast %cst_5 : f32 to vector<32x128xf32>
    %7 = arith.maximumf %5, %6 : vector<32x128xf32>
    %c0_6 = arith.constant 0 : index
    %c0_7 = arith.constant 0 : index
    %8 = vector.load %arg4[%c0_6, %c0_7] : memref<16x32xf32, #tpu.memory_space<vmem>>, vector<16x32xf32>
    %cst_8 = arith.constant dense<0.000000e+00> : vector<16x128xf32>
    %9 = tpu.matmul %8, %7, %cst_8 {dimension_numbers = #tpu.dot_dimension_numbers<[1], [0], [0], [1], [0, 0, 1, 1], [], []>} : vector<16x32xf32>, vector<32x128xf32>, vector<16x128xf32> -> vector<16x128xf32>
    %c0_9 = arith.constant 0 : index
    %c0_10 = arith.constant 0 : index
    %10 = vector.load %arg5[%c0_9, %c0_10] : memref<16x1xf32, #tpu.memory_space<vmem>>, vector<16x1xf32>
    %11 = vector.broadcast %10 : vector<16x1xf32> to vector<16x128xf32>
    %12 = arith.addf %9, %11 : vector<16x128xf32>
    %cst_11 = arith.constant 0.000000e+00 : f32
    %13 = vector.broadcast %cst_11 : f32 to vector<16x128xf32>
    %14 = arith.maximumf %12, %13 : vector<16x128xf32>
    %c0_12 = arith.constant 0 : index
    %c0_13 = arith.constant 0 : index
    %15 = vector.load %arg6[%c0_12, %c0_13] : memref<3x16xf32, #tpu.memory_space<vmem>>, vector<3x16xf32>
    %cst_14 = arith.constant dense<0.000000e+00> : vector<3x128xf32>
    %16 = tpu.matmul %15, %14, %cst_14 {dimension_numbers = #tpu.dot_dimension_numbers<[1], [0], [0], [1], [0, 0, 1, 1], [], []>} : vector<3x16xf32>, vector<16x128xf32>, vector<3x128xf32> -> vector<3x128xf32>
    %c0_15 = arith.constant 0 : index
    %c0_16 = arith.constant 0 : index
    %17 = vector.load %arg7[%c0_15, %c0_16] : memref<3x1xf32, #tpu.memory_space<vmem>>, vector<3x1xf32>
    %18 = vector.broadcast %17 : vector<3x1xf32> to vector<3x128xf32>
    %19 = arith.addf %16, %18 : vector<3x128xf32>
    %c0_17 = arith.constant 0 : index
    %c0_18 = arith.constant 0 : index
    %20 = vector.load %arg8[%c0_17, %c0_18] : memref<3x128xf32, #tpu.memory_space<vmem>>, vector<3x128xf32>
    tpu.vector_store %arg8[%c0_17, %c0_18], %19 {strides = array<i32>} : memref<3x128xf32, #tpu.memory_space<vmem>>, vector<3x128xf32>,
    return
  }
  func.func @transform_0(%arg0: i32) -> (i32, i32) {
    %c0_i32 = arith.constant 0 : i32
    %c0_i32_0 = arith.constant 0 : i32
    return %c0_i32, %arg0 : i32, i32
  }
  func.func @transform_1(%arg0: i32) -> (i32, i32) {
    %c0_i32 = arith.constant 0 : i32
    %c0_i32_0 = arith.constant 0 : i32
    %c0_i32_1 = arith.constant 0 : i32
    return %c0_i32, %c0_i32_0 : i32, i32
  }
  func.func @transform_2(%arg0: i32) -> (i32, i32) {
    %c0_i32 = arith.constant 0 : i32
    %c0_i32_0 = arith.constant 0 : i32
    %c0_i32_1 = arith.constant 0 : i32
    return %c0_i32, %c0_i32_0 : i32, i32
  }
  func.func @transform_3(%arg0: i32) -> (i32, i32) {
    %c0_i32 = arith.constant 0 : i32
    %c0_i32_0 = arith.constant 0 : i32
    %c0_i32_1 = arith.constant 0 : i32
    return %c0_i32, %c0_i32_0 : i32, i32
  }
  func.func @transform_4(%arg0: i32) -> (i32, i32) {
    %c0_i32 = arith.constant 0 : i32
    %c0_i32_0 = arith.constant 0 : i32
    %c0_i32_1 = arith.constant 0 : i32
    return %c0_i32, %c0_i32_0 : i32, i32
  }
  func.func @transform_5(%arg0: i32) -> (i32, i32) {
    %c0_i32 = arith.constant 0 : i32
    %c0_i32_0 = arith.constant 0 : i32
    %c0_i32_1 = arith.constant 0 : i32
    return %c0_i32, %c0_i32_0 : i32, i32
  }
  func.func @transform_6(%arg0: i32) -> (i32, i32) {
    %c0_i32 = arith.constant 0 : i32
    %c0_i32_0 = arith.constant 0 : i32
    %c0_i32_1 = arith.constant 0 : i32
    return %c0_i32, %c0_i32_0 : i32, i32
  }
  func.func @transform_7(%arg0: i32) -> (i32, i32) {
    %c0_i32 = arith.constant 0 : i32
    %c0_i32_0 = arith.constant 0 : i32
    return %c0_i32, %arg0 : i32, i32
  }
}

</mosaic_0001>

<llo_original>
// kernel: tpu_custom_call.1
$region0: #{tpu_custom_call.1}
  #allocation0 [shape = 'u32[]', space=smem, size = 0x4, offset = 0x4, fixed_abs, tag = 'smem constant byte address 0x4 - core index']
  #allocation1 [shape = 'u32[144,128]{1,0:T(1,128)}', space=vmem, size = 0x12000, scoped, tag = 'internal scratch']
  %s0 = inlined_call_operand.vmem [shape: f32[21,128], index: 0, kind: input, shape index: {}]
  %s1 = inlined_call_operand.vmem [shape: f32[32,21], index: 1, kind: input, shape index: {}]
  %s2 = inlined_call_operand.vmem [shape: f32[32,1], index: 2, kind: input, shape index: {}]
  %s3 = inlined_call_operand.vmem [shape: f32[16,32], index: 3, kind: input, shape index: {}]
  %s4 = inlined_call_operand.vmem [shape: f32[16,1], index: 4, kind: input, shape index: {}]
  %s5 = inlined_call_operand.vmem [shape: f32[3,16], index: 5, kind: input, shape index: {}]
  %s6 = inlined_call_operand.vmem [shape: f32[3,1], index: 6, kind: input, shape index: {}]
  %s7 = inlined_call_operand.hbm [shape: f32[3,128], index: 7, kind: output, shape index: {}]
  %s8 = sld [smem:[#allocation0]]
  $region38: #{tpu_custom_call.1} parent=0
    _
  %s10 = ssub.s32 1, %s8
  %s11 = scalar_select 0, %s10, %s8
  $region1: #{tpu_custom_call.1} parent=0
    #allocation2 [shape = 'u8[2048]{0}', space=vmem, size = 0x800, scoped, tag = 'output window, operand 0, single buffered']
    #allocation3 [shape = 's32[1]{0}', space=sflag, size = 0x4, scoped, tag = 'scoped memory for tpu_custom_call.1']
    %12 = vsyncpa [#allocation3], 0
    // Predicated region
    $region2: #{tpu_custom_call.1} parent=1 // pred_check
      _
    $region3: #{tpu_custom_call.1} parent=1 // pred_check_branch
      %14 = sbr.rel (0) target = $region5
    $region4: #{tpu_custom_call.1} parent=1 // pred_region
      _
    $region5: #{tpu_custom_call.1} parent=1 // pred_fallthru
      _
    // Predicated region
    $region6: #{tpu_custom_call.1} parent=1 // pred_check
      _
    $region7: #{tpu_custom_call.1} parent=1 // pred_check_branch
      %16 = sbr.rel (0) target = $region9
    $region8: #{tpu_custom_call.1} parent=1 // pred_region
      _
    $region9: #{tpu_custom_call.1} parent=1 // pred_fallthru
      _
    // Predicated region
    $region10: #{tpu_custom_call.1} parent=1 // pred_check
      _
    $region11: #{tpu_custom_call.1} parent=1 // pred_check_branch
      %18 = sbr.rel (0) target = $region13
    $region12: #{tpu_custom_call.1} parent=1 // pred_region
      _
    $region13: #{tpu_custom_call.1} parent=1 // pred_fallthru
      _
    // Predicated region
    $region14: #{tpu_custom_call.1} parent=1 // pred_check
      _
    $region15: #{tpu_custom_call.1} parent=1 // pred_check_branch
      %20 = sbr.rel (0) target = $region17
    $region16: #{tpu_custom_call.1} parent=1 // pred_region
      _
    $region17: #{tpu_custom_call.1} parent=1 // pred_fallthru
      _
    // Predicated region
    $region18: #{tpu_custom_call.1} parent=1 // pred_check
      _
    $region19: #{tpu_custom_call.1} parent=1 // pred_check_branch
      %22 = sbr.rel (0) target = $region21
    $region20: #{tpu_custom_call.1} parent=1 // pred_region
      _
    $region21: #{tpu_custom_call.1} parent=1 // pred_fallthru
      _
    // Predicated region
    $region22: #{tpu_custom_call.1} parent=1 // pred_check
      _
    $region23: #{tpu_custom_call.1} parent=1 // pred_check_branch
      %24 = sbr.rel (0) target = $region25
    $region24: #{tpu_custom_call.1} parent=1 // pred_region
      _
    $region25: #{tpu_custom_call.1} parent=1 // pred_fallthru
      _
    // Predicated region
    $region26: #{tpu_custom_call.1} parent=1 // pred_check
      _
    $region27: #{tpu_custom_call.1} parent=1 // pred_check_branch
      %26 = sbr.rel (0) target = $region29
    $region28: #{tpu_custom_call.1} parent=1 // pred_region
      _
    $region29: #{tpu_custom_call.1} parent=1 // pred_fallthru
      _
    %v27 = vld [vmem:[%s0] sm:$0xff]
    %v28 = vld [vmem:[%s0 + $0x8] sm:$0xff]
    %v29 = vld [vmem:[%s0 + $0x10] sm:$0x1f]
    %v30 = vld [vmem:[%s1] sm:$0xff]
    %v31 = vld [vmem:[%s1 + $0x8] sm:$0xff]
    %v32 = vld [vmem:[%s1 + $0x10] sm:$0xff]
    %v33 = vld [vmem:[%s1 + $0x18] sm:$0xff]
    %v34 = vld [vmem:[%s2] sm:$0xff]
    %v35 = vld [vmem:[%s2 + $0x8] sm:$0xff]
    %v36 = vld [vmem:[%s2 + $0x10] sm:$0xff]
    %v37 = vld [vmem:[%s2 + $0x18] sm:$0xff]
    %39 = vset.pattern.permute.xlu0 0
    %40 = vperm.xlu0 %39, %v34
    %v41 = vpop.permute.xlu0 %40
    %44 = vset.pattern.permute.xlu0 0
    %45 = vperm.xlu0 %44, %v35
    %v46 = vpop.permute.xlu0 %45
    %49 = vset.pattern.permute.xlu0 0
    %50 = vperm.xlu0 %49, %v36
    %v51 = vpop.permute.xlu0 %50
    %54 = vset.pattern.permute.xlu0 0
    %55 = vperm.xlu0 %54, %v37
    %v56 = vpop.permute.xlu0 %55
    %vm58 = vcmask 171008
    %v60 = vsel %vm58, %v30, 0
    %v63 = vsel %vm58, %v31, 0
    %v66 = vsel %vm58, %v32, 0
    %v69 = vsel %vm58, %v33, 0
    %vm71 = vcmask 1044480
    %v73 = vsel %vm71, %v29, 0
    %75 = vmatprep.subr.mxu0 0.0
    %76 = vmatpush1.msra.mxu0 %v27
    %77 = vmatprep.subr.mxu0 0.0
    %78 = vmatpush1.msra.mxu0 %v28
    %79 = vmatprep.subr.mxu0 0.0
    %80 = vmatpush1.msra.mxu0 %v73
    %81 = vmatprep.subr.mxu0 0.0
    %82 = vmatpush1.msra.mxu0 0.0
    %83 = vmatprep.subr.mxu0 0.0
    %84 = vmatpush1.msra.mxu0 0.0
    %85 = vmatprep.subr.mxu0 0.0
    %86 = vmatpush1.msra.mxu0 0.0
    %87 = vmatprep.subr.mxu0 0.0
    %88 = vmatpush1.msra.mxu0 0.0
    %89 = vmatprep.subr.mxu0 0.0
    %90 = vmatpush1.msra.mxu0 0.0
    %91 = vmatprep.subr.mxu0 0.0
    %92 = vmatpush1.msra.mxu0 0.0
    %93 = vmatprep.subr.mxu0 0.0
    %94 = vmatpush1.msra.mxu0 0.0
    %95 = vmatprep.subr.mxu0 0.0
    %96 = vmatpush1.msra.mxu0 0.0
    %97 = vmatprep.subr.mxu0 0.0
    %98 = vmatpush1.msra.mxu0 0.0
    %99 = vmatprep.subr.mxu0 0.0
    %100 = vmatpush1.msra.mxu0 0.0
    %101 = vmatprep.subr.mxu0 0.0
    %102 = vmatpush1.msra.mxu0 0.0
    %103 = vmatprep.subr.mxu0 0.0
    %104 = vmatpush1.msra.mxu0 0.0
    %105 = vmatprep.subr.mxu0 0.0
    %106 = vmatpush1.msra.mxu0 0.0
    %107 = vmatprep.subr.mxu0 0.0
    %108 = vmatpush1.msra.mxu0 0.0
    %109 = vmatprep.subr.mxu0 0.0
    %110 = vmatpush1.msra.mxu0 0.0
    %111 = vmatprep.subr.mxu0 0.0
    %112 = vmatpush1.msra.mxu0 0.0
    %113 = vmatprep.subr.mxu0 0.0
    %114 = vmatpush1.msra.mxu0 0.0
    %115 = vmatprep.subr.mxu0 0.0
    %116 = vmatpush1.msra.mxu0 0.0
    %117 = vmatprep.subr.mxu0 0.0
    %118 = vmatpush1.msra.mxu0 0.0
    %119 = vmatprep.subr.mxu0 0.0
    %120 = vmatpush1.msra.mxu0 0.0
    %121 = vmatprep.subr.mxu0 0.0
    %122 = vmatpush1.msra.mxu0 0.0
    %123 = vmatprep.subr.mxu0 0.0
    %124 = vmatpush1.msra.mxu0 0.0
    %125 = vmatprep.subr.mxu0 0.0
    %126 = vmatpush1.msra.mxu0 0.0
    %127 = vmatprep.subr.mxu0 0.0
    %128 = vmatpush1.msra.mxu0 0.0
    %129 = vmatprep.subr.mxu0 0.0
    %130 = vmatpush1.msra.mxu0 0.0
    %131 = vmatprep.subr.mxu0 0.0
    %132 = vmatpush1.msra.mxu0 0.0
    %133 = vmatprep.subr.mxu0 0.0
    %134 = vmatpush1.msra.mxu0 0.0
    %135 = vmatprep.subr.mxu0 0.0
    %136 = vmatpush1.msra.mxu0 0.0
    %137 = vmatprep.subr.mxu0 0.0
    %138 = vmatpush1.msra.mxu0 0.0
    %139 = vmatprep.mubr.f32.mxu0 0.0
    %140 = vmatmul.mubr.f32.gmra.mrb[0].mxu0 %v60
    %v141 = vpop.f32.mrb[0].mxu0
    %v142 = vadd.f32 %v41, %v141
    %v143 = vpop.f32.mrb[0].mxu0
    %144 = vmatprep.mubr.f32.mxu0 0.0
    %145 = vmatmul.mubr.f32.gmra.mrb[0].mxu0 %v63
    %v146 = vpop.f32.mrb[0].mxu0
    %v147 = vadd.f32 %v46, %v146
    %v148 = vpop.f32.mrb[0].mxu0
    %149 = vmatprep.mubr.f32.mxu0 0.0
    %150 = vmatmul.mubr.f32.gmra.mrb[0].mxu0 %v66
    %v151 = vpop.f32.mrb[0].mxu0
    %v152 = vadd.f32 %v51, %v151
    %v153 = vpop.f32.mrb[0].mxu0
    %154 = vmatprep.mubr.f32.mxu0 0.0
    %155 = vmatmul.mubr.f32.gmra.mrb[0].mxu0 %v69
    %v156 = vpop.f32.mrb[0].mxu0
    %v157 = vadd.f32 %v56, %v156
    %v158 = vpop.f32.mrb[0].mxu0
    %159 = vdwg.mxu0
    %v160 = vmax.f32 %v142, 0.0
    %v161 = vmax.f32 %v147, 0.0
    %v162 = vmax.f32 %v152, 0.0
    %v163 = vmax.f32 %v157, 0.0
    %v164 = vld [vmem:[%s3] sm:$0xff]
    %v165 = vld [vmem:[%s3 + $0x8] sm:$0xff]
    %v166 = vld [vmem:[%s4] sm:$0xff]
    %v167 = vld [vmem:[%s4 + $0x8] sm:$0xff]
    %169 = vset.pattern.permute.xlu0 0
    %170 = vperm.xlu0 %169, %v166
    %v171 = vpop.permute.xlu0 %170
    %174 = vset.pattern.permute.xlu0 0
    %175 = vperm.xlu0 %174, %v167
    %v176 = vpop.permute.xlu0 %175
    %vm178 = vcmask 261120
    %v180 = vsel %vm178, %v164, 0
    %v183 = vsel %vm178, %v165, 0
    %185 = vmatprep.subr.mxu0 0.0
    %186 = vmatpush1.msra.mxu0 %v160
    %187 = vmatprep.subr.mxu0 0.0
    %188 = vmatpush1.msra.mxu0 %v161
    %189 = vmatprep.subr.mxu0 0.0
    %190 = vmatpush1.msra.mxu0 %v162
    %191 = vmatprep.subr.mxu0 0.0
    %192 = vmatpush1.msra.mxu0 %v163
    %193 = vmatprep.subr.mxu0 0.0
    %194 = vmatpush1.msra.mxu0 0.0
    %195 = vmatprep.subr.mxu0 0.0
    %196 = vmatpush1.msra.mxu0 0.0
    %197 = vmatprep.subr.mxu0 0.0
    %198 = vmatpush1.msra.mxu0 0.0
    %199 = vmatprep.subr.mxu0 0.0
    %200 = vmatpush1.msra.mxu0 0.0
    %201 = vmatprep.subr.mxu0 0.0
    %202 = vmatpush1.msra.mxu0 0.0
    %203 = vmatprep.subr.mxu0 0.0
    %204 = vmatpush1.msra.mxu0 0.0
    %205 = vmatprep.subr.mxu0 0.0
    %206 = vmatpush1.msra.mxu0 0.0
    %207 = vmatprep.subr.mxu0 0.0
    %208 = vmatpush1.msra.mxu0 0.0
    %209 = vmatprep.subr.mxu0 0.0
    %210 = vmatpush1.msra.mxu0 0.0
    %211 = vmatprep.subr.mxu0 0.0
    %212 = vmatpush1.msra.mxu0 0.0
    %213 = vmatprep.subr.mxu0 0.0
    %214 = vmatpush1.msra.mxu0 0.0
    %215 = vmatprep.subr.mxu0 0.0
    %216 = vmatpush1.msra.mxu0 0.0
    %217 = vmatprep.subr.mxu0 0.0
    %218 = vmatpush1.msra.mxu0 0.0
    %219 = vmatprep.subr.mxu0 0.0
    %220 = vmatpush1.msra.mxu0 0.0
    %221 = vmatprep.subr.mxu0 0.0
    %222 = vmatpush1.msra.mxu0 0.0
    %223 = vmatprep.subr.mxu0 0.0
    %224 = vmatpush1.msra.mxu0 0.0
    %225 = vmatprep.subr.mxu0 0.0
    %226 = vmatpush1.msra.mxu0 0.0
    %227 = vmatprep.subr.mxu0 0.0
    %228 = vmatpush1.msra.mxu0 0.0
    %229 = vmatprep.subr.mxu0 0.0
    %230 = vmatpush1.msra.mxu0 0.0
    %231 = vmatprep.subr.mxu0 0.0
    %232 = vmatpush1.msra.mxu0 0.0
    %233 = vmatprep.subr.mxu0 0.0
    %234 = vmatpush1.msra.mxu0 0.0
    %235 = vmatprep.subr.mxu0 0.0
    %236 = vmatpush1.msra.mxu0 0.0
    %237 = vmatprep.subr.mxu0 0.0
    %238 = vmatpush1.msra.mxu0 0.0
    %239 = vmatprep.subr.mxu0 0.0
    %240 = vmatpush1.msra.mxu0 0.0
    %241 = vmatprep.subr.mxu0 0.0
    %242 = vmatpush1.msra.mxu0 0.0
    %243 = vmatprep.subr.mxu0 0.0
    %244 = vmatpush1.msra.mxu0 0.0
    %245 = vmatprep.subr.mxu0 0.0
    %246 = vmatpush1.msra.mxu0 0.0
    %247 = vmatprep.subr.mxu0 0.0
    %248 = vmatpush1.msra.mxu0 0.0
    %249 = vmatprep.mubr.f32.mxu0 0.0
    %250 = vmatmul.mubr.f32.gmra.mrb[0].mxu0 %v180
    %v251 = vpop.f32.mrb[0].mxu0
    %v252 = vadd.f32 %v171, %v251
    %v253 = vpop.f32.mrb[0].mxu0
    %254 = vmatprep.mubr.f32.mxu0 0.0
    %255 = vmatmul.mubr.f32.gmra.mrb[0].mxu0 %v183
    %v256 = vpop.f32.mrb[0].mxu0
    %v257 = vadd.f32 %v176, %v256
    %v258 = vpop.f32.mrb[0].mxu0
    %259 = vdwg.mxu0
    %v260 = vmax.f32 %v252, 0.0
    %v261 = vmax.f32 %v257, 0.0
    %v262 = vld [vmem:[%s5] sm:$0x7]
    %v263 = vld [vmem:[%s6] sm:$0x7]
    %265 = vset.pattern.permute.xlu0 0
    %266 = vperm.xlu0 %265, %v263
    %v267 = vpop.permute.xlu0 %266
    %vm269 = vcmask 130048
    %v271 = vsel %vm269, %v262, 0
    %273 = vmatprep.subr.mxu0 0.0
    %274 = vmatpush1.msra.mxu0 %v260
    %275 = vmatprep.subr.mxu0 0.0
    %276 = vmatpush1.msra.mxu0 %v261
    %277 = vmatprep.subr.mxu0 0.0
    %278 = vmatpush1.msra.mxu0 0.0
    %279 = vmatprep.subr.mxu0 0.0
    %280 = vmatpush1.msra.mxu0 0.0
    %281 = vmatprep.subr.mxu0 0.0
    %282 = vmatpush1.msra.mxu0 0.0
    %283 = vmatprep.subr.mxu0 0.0
    %284 = vmatpush1.msra.mxu0 0.0
    %285 = vmatprep.subr.mxu0 0.0
    %286 = vmatpush1.msra.mxu0 0.0
    %287 = vmatprep.subr.mxu0 0.0
    %288 = vmatpush1.msra.mxu0 0.0
    %289 = vmatprep.subr.mxu0 0.0
    %290 = vmatpush1.msra.mxu0 0.0
    %291 = vmatprep.subr.mxu0 0.0
    %292 = vmatpush1.msra.mxu0 0.0
    %293 = vmatprep.subr.mxu0 0.0
    %294 = vmatpush1.msra.mxu0 0.0
    %295 = vmatprep.subr.mxu0 0.0
    %296 = vmatpush1.msra.mxu0 0.0
    %297 = vmatprep.subr.mxu0 0.0
    %298 = vmatpush1.msra.mxu0 0.0
    %299 = vmatprep.subr.mxu0 0.0
    %300 = vmatpush1.msra.mxu0 0.0
    %301 = vmatprep.subr.mxu0 0.0
    %302 = vmatpush1.msra.mxu0 0.0
    %303 = vmatprep.subr.mxu0 0.0
    %304 = vmatpush1.msra.mxu0 0.0
    %305 = vmatprep.subr.mxu0 0.0
    %306 = vmatpush1.msra.mxu0 0.0
    %307 = vmatprep.subr.mxu0 0.0
    %308 = vmatpush1.msra.mxu0 0.0
    %309 = vmatprep.subr.mxu0 0.0
    %310 = vmatpush1.msra.mxu0 0.0
    %311 = vmatprep.subr.mxu0 0.0
    %312 = vmatpush1.msra.mxu0 0.0
    %313 = vmatprep.subr.mxu0 0.0
    %314 = vmatpush1.msra.mxu0 0.0
    %315 = vmatprep.subr.mxu0 0.0
    %316 = vmatpush1.msra.mxu0 0.0
    %317 = vmatprep.subr.mxu0 0.0
    %318 = vmatpush1.msra.mxu0 0.0
    %319 = vmatprep.subr.mxu0 0.0
    %320 = vmatpush1.msra.mxu0 0.0
    %321 = vmatprep.subr.mxu0 0.0
    %322 = vmatpush1.msra.mxu0 0.0
    %323 = vmatprep.subr.mxu0 0.0
    %324 = vmatpush1.msra.mxu0 0.0
    %325 = vmatprep.subr.mxu0 0.0
    %326 = vmatpush1.msra.mxu0 0.0
    %327 = vmatprep.subr.mxu0 0.0
    %328 = vmatpush1.msra.mxu0 0.0
    %329 = vmatprep.subr.mxu0 0.0
    %330 = vmatpush1.msra.mxu0 0.0
    %331 = vmatprep.subr.mxu0 0.0
    %332 = vmatpush1.msra.mxu0 0.0
    %333 = vmatprep.subr.mxu0 0.0
    %334 = vmatpush1.msra.mxu0 0.0
    %335 = vmatprep.subr.mxu0 0.0
    %336 = vmatpush1.msra.mxu0 0.0
    %337 = vmatprep.mubr.f32.mxu0 0.0
    %338 = vmatmul.mubr.f32.gmra.mrb[0].mxu0 %v271
    %v339 = vpop.f32.mrb[0].mxu0
    %v340 = vadd.f32 %v267, %v339
    %v341 = vpop.f32.mrb[0].mxu0
    %342 = vdwg.mxu0
    %343 = vst [vmem:[#allocation2] sm:$0x7] %v340
    // Predicated region
    $region30: #{tpu_custom_call.1} parent=1 // pred_check
      _
    $region31: #{tpu_custom_call.1} parent=1 // pred_check_branch
      %345 = sbr.rel (0) target = $region33
    $region32: #{tpu_custom_call.1} parent=1 // pred_region
      %s347 = ssub.s32 64, 64
      %348 = vsyncadd [#allocation3], %s347
      %s350 = sshll.u32 [#allocation2], 4
      %s351 = int_to_ptr.vmem [resolvable:$true] %s350
      %353 = dma.vmem_to_hbm [thread:$0]  %s351, 64, %s7, [#allocation3]
    $region33: #{tpu_custom_call.1} parent=1 // pred_fallthru
      _
    // Predicated region
    $region34: #{tpu_custom_call.1} parent=1 // pred_check
      _
    $region35: #{tpu_custom_call.1} parent=1 // pred_check_branch
      %355 = sbr.rel (0) target = $region37
    $region36: #{tpu_custom_call.1} parent=1 // pred_region
      %356 = dma.done [#allocation3], 64
    $region37: #{tpu_custom_call.1} parent=1 // pred_fallthru
      _
    %357 = vsyncpa [#allocation3], 1

</llo_original>
